<compile_context>
chip_gen: v6e
topology: v6e:2x2x1
jax: 0.10.0
libtpu: 0.0.40
codegen_flags: <defaults>
</compile_context>

<pallas_src>
import jax
import jax.numpy as jnp
from jax.experimental import pallas as pl
from jax.experimental.pallas import tpu as pltpu


# ---------------------------------------------------------------------------
# helpers
# ---------------------------------------------------------------------------
def _round_up(x, m):
    return (x + m - 1) // m * m


def _pad2d(x, rows, cols, dtype):
    r, c = x.shape
    return jnp.pad(x.astype(dtype), ((0, rows - r), (0, cols - c)))


def _tile(n, max_tile):
    # tile size: multiple of 128, no larger than max_tile, no larger than
    # the 128-rounded problem size.
    return min(max_tile, _round_up(n, 128))


# ---------------------------------------------------------------------------
# Pallas kernels
# ---------------------------------------------------------------------------
def _gcn_s_kernel(adj_ref, e_k_ref, e_row_ref, w_ref, o_ref, acc_ref):
    # out_rows = tanh((S @ U) @ W_s) + U_rows         (hop = 1)
    k = pl.program_id(1)

    @pl.when(k == 0)
    def _():
        acc_ref[...] = jnp.zeros_like(acc_ref)

    acc_ref[...] += jnp.dot(adj_ref[...], e_k_ref[...],
                            preferred_element_type=jnp.float32)

    @pl.when(k == pl.num_programs(1) - 1)
    def _():
        h = jnp.tanh(jnp.dot(acc_ref[...], w_ref[...],
                             preferred_element_type=jnp.float32))
        o_ref[...] = (h + e_row_ref[...].astype(jnp.float32)).astype(o_ref.dtype)


def _gcn_a_kernel(adj_ref, e_k_ref, e_row_ref, w_ref, add_ref, scale_ref,
                  o_ref, acc_ref):
    # light = 0.5 * (E + tanh((A @ E) @ W_a))         (mean over hops 0,1)
    # out   = scale_row * light + add_row             (fused 0.5*U_s blend:
    #          user rows: 0.5*light + 0.5*U_s ; item rows: 1.0*light + 0)
    k = pl.program_id(1)

    @pl.when(k == 0)
    def _():
        acc_ref[...] = jnp.zeros_like(acc_ref)

    acc_ref[...] += jnp.dot(adj_ref[...], e_k_ref[...],
                            preferred_element_type=jnp.float32)

    @pl.when(k == pl.num_programs(1) - 1)
    def _():
        h = jnp.tanh(jnp.dot(acc_ref[...], w_ref[...],
                             preferred_element_type=jnp.float32))
        light = 0.5 * (e_row_ref[...].astype(jnp.float32) + h)
        o_ref[...] = (scale_ref[...] * light + add_ref[...]).astype(o_ref.dtype)


# ---------------------------------------------------------------------------
# pallas_call wrappers
# ---------------------------------------------------------------------------
def _common_specs(tm, tk, hp):
    adj_spec = pl.BlockSpec((tm, tk), lambda i, k: (i, k))
    e_k_spec = pl.BlockSpec((tk, hp), lambda i, k: (k, 0))
    e_row_spec = pl.BlockSpec((tm, hp), lambda i, k: (i, 0))
    w_spec = pl.BlockSpec((hp, hp), lambda i, k: (0, 0))
    out_spec = pl.BlockSpec((tm, hp), lambda i, k: (i, 0))
    return adj_spec, e_k_spec, e_row_spec, w_spec, out_spec


def _compiler_params(tm, tk, hp, extra_bytes=0):
    est = (2 * (tm * tk * 2          # adjacency tile (bf16, double buffered)
                + tk * hp * 2        # E rows for the K product (bf16)
                + tm * hp * 2        # E rows for the residual (bf16)
                + hp * hp * 4        # W (f32)
                + tm * hp * 4        # output tile (f32)
                + extra_bytes)
           + tm * hp * 4             # accumulator scratch
           + (4 << 20))              # margin
    return pltpu.CompilerParams(
        dimension_semantics=("parallel", "arbitrary"),
        vmem_limit_bytes=int(max(est, 32 << 20)),
    )


def gcn_s(S, U, Ws, *, max_tile=512):
    n = S.shape[0]
    h = U.shape[1]
    tm = tk = _tile(n, max_tile)
    p = _round_up(n, tm)
    hp = _round_up(h, 128)

    S_p = _pad2d(S, p, p, jnp.bfloat16)
    U_p = _pad2d(U, p, hp, jnp.bfloat16)
    W_p = _pad2d(Ws, hp, hp, jnp.float32)

    adj_spec, e_k_spec, e_row_spec, w_spec, out_spec = _common_specs(tm, tk, hp)
    grid = (p // tm, p // tk)

    flops = 2 * p * p * hp + 2 * p * hp * hp
    bytes_accessed = S_p.size * 2 + 2 * U_p.size * 2 + W_p.size * 4 + p * hp * 4

    out = pl.pallas_call(
        _gcn_s_kernel,
        out_shape=jax.ShapeDtypeStruct((p, hp), jnp.float32),
        grid_spec=pltpu.PrefetchScalarGridSpec(
            num_scalar_prefetch=0,
            grid=grid,
            in_specs=[adj_spec, e_k_spec, e_row_spec, w_spec],
            out_specs=out_spec,
            scratch_shapes=[pltpu.VMEM((tm, hp), jnp.float32)],
        ),
        compiler_params=_compiler_params(tm, tk, hp),
        cost_estimate=pl.CostEstimate(flops=int(flops),
                                      transcendentals=int(p * hp),
                                      bytes_accessed=int(bytes_accessed)),
    )(S_p, U_p, U_p, W_p)
    return out  # (p, hp) f32; padded rows/cols are zero -- caller slices


def gcn_a(A, E, Wa, blend_add, blend_scale, *, max_tile=512):
    n = A.shape[0]
    h = E.shape[1]
    tm = tk = _tile(n, max_tile)
    p = _round_up(n, tm)
    hp = _round_up(h, 128)
    assert blend_add.shape == (p, hp) and blend_scale.shape == (p, 1)

    A_p = _pad2d(A, p, p, jnp.bfloat16)
    E_p = _pad2d(E, p, hp, jnp.bfloat16)
    W_p = _pad2d(Wa, hp, hp, jnp.float32)

    adj_spec, e_k_spec, e_row_spec, w_spec, out_spec = _common_specs(tm, tk, hp)
    add_spec = pl.BlockSpec((tm, hp), lambda i, k: (i, 0))
    scale_spec = pl.BlockSpec((tm, 1), lambda i, k: (i, 0))
    grid = (p // tm, p // tk)

    flops = 2 * p * p * hp + 2 * p * hp * hp
    bytes_accessed = (A_p.size * 2 + 2 * E_p.size * 2 + W_p.size * 4
                      + blend_add.size * 4 + blend_scale.size * 4 + p * hp * 4)

    out = pl.pallas_call(
        _gcn_a_kernel,
        out_shape=jax.ShapeDtypeStruct((p, hp), jnp.float32),
        grid_spec=pltpu.PrefetchScalarGridSpec(
            num_scalar_prefetch=0,
            grid=grid,
            in_specs=[adj_spec, e_k_spec, e_row_spec, w_spec,
                      add_spec, scale_spec],
            out_specs=out_spec,
            scratch_shapes=[pltpu.VMEM((tm, hp), jnp.float32)],
        ),
        compiler_params=_compiler_params(
            tm, tk, hp, extra_bytes=tm * hp * 4 + tm * 128 * 4),
        cost_estimate=pl.CostEstimate(flops=int(flops),
                                      transcendentals=int(p * hp),
                                      bytes_accessed=int(bytes_accessed)),
    )(A_p, E_p, E_p, W_p, blend_add, blend_scale)
    return out  # (p, hp) f32


# ---------------------------------------------------------------------------
# Python wrapper = GraphRec.forward
# ---------------------------------------------------------------------------
def graphrec_forward(users, pos, neg, user_embs, item_embs, S, A,
                     W_social, W_item, *, max_tile=512):
    n_users, hidden = user_embs.shape
    n_items = item_embs.shape[0]
    n_all = n_users + n_items

    # --- social GCN:  U_s = tanh((S @ U) @ W_s) + U  (Pallas, tiled) --------
    u_s_pad = gcn_s(S, user_embs, W_social, max_tile=max_tile)  # (Pu, Hp) f32

    # --- user-item GCN with fused epilogue blend -----------------------------
    all_emb = jnp.concatenate([user_embs, item_embs], axis=0)

    tm = _tile(n_all, max_tile)
    pa = _round_up(n_all, tm)
    hp = _round_up(hidden, 128)

    # blend_add = 0.5*U_s on user rows, 0 elsewhere (rows beyond n_all = pad).
    blend_add = jnp.zeros((pa, hp), jnp.float32)
    blend_add = blend_add.at[:n_users].set(0.5 * u_s_pad[:n_users])
    # blend_scale = 0.5 (user rows) / 1.0 (item rows) / 0.0 (pad rows).
    row_ids = jnp.arange(pa)[:, None]
    blend_scale = jnp.where(row_ids < n_users, 0.5,
                            jnp.where(row_ids < n_all, 1.0, 0.0)
                            ).astype(jnp.float32)

    out_pad = gcn_a(A, all_emb, W_item, blend_add, blend_scale,
                    max_tile=max_tile)

    all_user_embs = out_pad[:n_users, :hidden]
    all_item_embs = out_pad[n_users:n_all, :hidden]

    users_emb = all_user_embs[users]
    pos_emb = all_item_embs[pos]
    neg_emb = all_item_embs[neg]
    return users_emb, pos_emb, neg_emb


# ---------------------------------------------------------------------------
# Pure-JAX references
# ---------------------------------------------------------------------------
def graphrec_forward_ref(users, pos, neg, user_embs, item_embs, S, A,
                         W_social, W_item, *, quantize_bf16=True):
    f32 = jnp.float32
    if quantize_bf16:
        q = lambda x: x.astype(jnp.bfloat16).astype(f32)
    else:
        q = lambda x: x.astype(f32)
    n_users = user_embs.shape[0]
    U, I = q(user_embs), q(item_embs)
    Sq, Aq = q(S), q(A)
    u_s = jnp.tanh((Sq @ U) @ W_social) + U
    all_emb = jnp.concatenate([U, I], axis=0)
    hop1 = jnp.tanh((Aq @ all_emb) @ W_item)
    light = 0.5 * (all_emb + hop1)
    u_a, i_a = light[:n_users], light[n_users:]
    all_user = 0.5 * u_s + 0.5 * u_a
    return all_user[users], i_a[pos], i_a[neg]


# ---------------------------------------------------------------------------
if __name__ == "__main__":
    # sizes chosen non-multiples of 128 so padding + a multi-step (2x2 / 4x4)
    # grid is actually exercised with max_tile=128.
    n_users, n_items, hidden, batch = 200, 312, 32, 8
    n_all = n_users + n_items

    key = jax.random.PRNGKey(0)
    k = jax.random.split(key, 8)

    user_embs = jax.random.normal(k[0], (n_users, hidden), jnp.float32) * 0.1
    item_embs = jax.random.normal(k[1], (n_items, hidden), jnp.float32) * 0.1

    # dense row-normalized adjacencies
    S = jax.random.uniform(k[2], (n_users, n_users), jnp.float32)
    S = S / jnp.sum(S, axis=1, keepdims=True)
    A = jax.random.uniform(k[3], (n_all, n_all), jnp.float32)
    A = A / jnp.sum(A, axis=1, keepdims=True)

    # xavier_uniform init for the hop-0 weights (bound = sqrt(6/(H+H)))
    bound = (6.0 / (hidden + hidden)) ** 0.5
    W_social = jax.random.uniform(k[4], (hidden, hidden), jnp.float32, -bound, bound)
    W_item = jax.random.uniform(k[5], (hidden, hidden), jnp.float32, -bound, bound)

    users = jax.random.randint(k[6], (batch,), 0, n_users)
    pos = jax.random.randint(k[7], (batch,), 0, n_items)
    neg = (pos + 7) % n_items

    users_emb, pos_emb, neg_emb = graphrec_forward(
        users, pos, neg, user_embs, item_embs, S, A, W_social, W_item,
        max_tile=128,
    )
    jax.block_until_ready((users_emb, pos_emb, neg_emb))

    assert users_emb.shape == (batch, hidden)
    assert pos_emb.shape == (batch, hidden)
    assert neg_emb.shape == (batch, hidden)

    # tight check vs reference using the same bf16 input quantization
    ref_u, ref_p, ref_n = graphrec_forward_ref(
        users, pos, neg, user_embs, item_embs, S, A, W_social, W_item,
        quantize_bf16=True,
    )
    assert jnp.allclose(users_emb, ref_u, atol=2e-3), "user mismatch (bf16 ref)"
    assert jnp.allclose(pos_emb, ref_p, atol=2e-3), "pos mismatch (bf16 ref)"
    assert jnp.allclose(neg_emb, ref_n, atol=2e-3), "neg mismatch (bf16 ref)"

    # loose check vs the full-f32 reference (bf16 input quantization only)
    ref_u32, ref_p32, ref_n32 = graphrec_forward_ref(
        users, pos, neg, user_embs, item_embs, S, A, W_social, W_item,
        quantize_bf16=False,
    )
    assert jnp.allclose(users_emb, ref_u32, atol=3e-2), "user mismatch (f32 ref)"
    assert jnp.allclose(pos_emb, ref_p32, atol=3e-2), "pos mismatch (f32 ref)"
    assert jnp.allclose(neg_emb, ref_n32, atol=3e-2), "neg mismatch (f32 ref)"

    print("KERNEL_OK")
</pallas_src>

<mosaic_0001>
module attributes {stable_mosaic.version = 11 : i64} {
  func.func @_gcn_s_kernel(%arg0: i32, %arg1: i32, %arg2: memref<128x128xbf16, #tpu.memory_space<vmem>>, %arg3: memref<128x128xbf16, #tpu.memory_space<vmem>>, %arg4: memref<128x128xbf16, #tpu.memory_space<vmem>>, %arg5: memref<128x128xf32, #tpu.memory_space<vmem>>, %arg6: memref<128x128xf32, #tpu.memory_space<vmem>>, %arg7: memref<128x128xf32, #tpu.memory_space<vmem>>) attributes {dimension_semantics = [#tpu.dimension_semantics<parallel>, #tpu.dimension_semantics<arbitrary>], iteration_bounds = array<i64: 2, 2>, scalar_prefetch = 0 : i64, scratch_operands = 1 : i64, tpu.core_type = #tpu.core_type<tc>, window_params = [{transform_indices = @transform_0, window_bounds = array<i64: 128, 128>}, {transform_indices = @transform_1, window_bounds = array<i64: 128, 128>}, {transform_indices = @transform_2, window_bounds = array<i64: 128, 128>}, {pipeline_mode = #tpu.pipeline_mode<synchronous>, transform_indices = @transform_3, window_bounds = array<i64: 128, 128>}, {transform_indices = @transform_4, window_bounds = array<i64: 128, 128>}]} {
    %c0_i32 = arith.constant 0 : i32
    %0 = arith.cmpi eq, %arg1, %c0_i32 : i32
    %1 = arith.extui %0 : i1 to i32
    %c0_i32_0 = arith.constant 0 : i32
    %2 = arith.cmpi ne, %1, %c0_i32_0 : i32
    scf.if %2 {
      %cst_9 = arith.constant 0.000000e+00 : f32
      %12 = vector.broadcast %cst_9 : f32 to vector<128x128xf32>
      %c0_10 = arith.constant 0 : index
      %c0_11 = arith.constant 0 : index
      %13 = vector.load %arg7[%c0_10, %c0_11] : memref<128x128xf32, #tpu.memory_space<vmem>>, vector<128x128xf32>
      tpu.vector_store %arg7[%c0_10, %c0_11], %12 {strides = array<i32>} : memref<128x128xf32, #tpu.memory_space<vmem>>, vector<128x128xf32>,
    } else {
    }
    %c0 = arith.constant 0 : index
    %c0_1 = arith.constant 0 : index
    %3 = vector.load %arg7[%c0, %c0_1] : memref<128x128xf32, #tpu.memory_space<vmem>>, vector<128x128xf32>
    %c0_2 = arith.constant 0 : index
    %c0_3 = arith.constant 0 : index
    %4 = vector.load %arg2[%c0_2, %c0_3] : memref<128x128xbf16, #tpu.memory_space<vmem>>, vector<128x128xbf16>
    %c0_4 = arith.constant 0 : index
    %c0_5 = arith.constant 0 : index
    %5 = vector.load %arg3[%c0_4, %c0_5] : memref<128x128xbf16, #tpu.memory_space<vmem>>, vector<128x128xbf16>
    %cst = arith.constant dense<0.000000e+00> : vector<128x128xf32>
    %6 = tpu.matmul %4, %5, %cst {dimension_numbers = #tpu.dot_dimension_numbers<[1], [0], [0], [1], [0, 0, 1, 1], [], []>} : vector<128x128xbf16>, vector<128x128xbf16>, vector<128x128xf32> -> vector<128x128xf32>
    %7 = arith.addf %3, %6 : vector<128x128xf32>
    %c0_6 = arith.constant 0 : index
    %c0_7 = arith.constant 0 : index
    %8 = vector.load %arg7[%c0_6, %c0_7] : memref<128x128xf32, #tpu.memory_space<vmem>>, vector<128x128xf32>
    tpu.vector_store %arg7[%c0_6, %c0_7], %7 {strides = array<i32>} : memref<128x128xf32, #tpu.memory_space<vmem>>, vector<128x128xf32>,
    %c1_i32 = arith.constant 1 : i32
    %9 = arith.cmpi eq, %arg1, %c1_i32 : i32
    %10 = arith.extui %9 : i1 to i32
    %c0_i32_8 = arith.constant 0 : i32
    %11 = arith.cmpi ne, %10, %c0_i32_8 : i32
    scf.if %11 {
      %c0_9 = arith.constant 0 : index
      %c0_10 = arith.constant 0 : index
      %12 = vector.load %arg7[%c0_9, %c0_10] : memref<128x128xf32, #tpu.memory_space<vmem>>, vector<128x128xf32>
      %c0_11 = arith.constant 0 : index
      %c0_12 = arith.constant 0 : index
      %13 = vector.load %arg5[%c0_11, %c0_12] : memref<128x128xf32, #tpu.memory_space<vmem>>, vector<128x128xf32>
      %cst_13 = arith.constant dense<0.000000e+00> : vector<128x128xf32>
      %14 = tpu.matmul %12, %13, %cst_13 {dimension_numbers = #tpu.dot_dimension_numbers<[1], [0], [0], [1], [0, 0, 1, 1], [], []>} : vector<128x128xf32>, vector<128x128xf32>, vector<128x128xf32> -> vector<128x128xf32>
      %15 = math.tanh %14 : vector<128x128xf32>
      %c0_14 = arith.constant 0 : index
      %c0_15 = arith.constant 0 : index
      %16 = vector.load %arg4[%c0_14, %c0_15] : memref<128x128xbf16, #tpu.memory_space<vmem>>, vector<128x128xbf16>
      %17 = arith.extf %16 : vector<128x128xbf16> to vector<128x128xf32>
      %18 = arith.addf %15, %17 : vector<128x128xf32>
      %c0_16 = arith.constant 0 : index
      %c0_17 = arith.constant 0 : index
      %19 = vector.load %arg6[%c0_16, %c0_17] : memref<128x128xf32, #tpu.memory_space<vmem>>, vector<128x128xf32>
      tpu.vector_store %arg6[%c0_16, %c0_17], %18 {strides = array<i32>} : memref<128x128xf32, #tpu.memory_space<vmem>>, vector<128x128xf32>,
    } else {
    }
    return
  }
  func.func @transform_0(%arg0: i32, %arg1: i32) -> (i32, i32) {
    %c0_i32 = arith.constant 0 : i32
    return %arg0, %arg1 : i32, i32
  }
  func.func @transform_1(%arg0: i32, %arg1: i32) -> (i32, i32) {
    %c0_i32 = arith.constant 0 : i32
    %c0_i32_0 = arith.constant 0 : i32
    return %arg1, %c0_i32 : i32, i32
  }
  func.func @transform_2(%arg0: i32, %arg1: i32) -> (i32, i32) {
    %c0_i32 = arith.constant 0 : i32
    %c0_i32_0 = arith.constant 0 : i32
    return %arg0, %c0_i32 : i32, i32
  }
  func.func @transform_3(%arg0: i32, %arg1: i32) -> (i32, i32) {
    %c0_i32 = arith.constant 0 : i32
    %c0_i32_0 = arith.constant 0 : i32
    %c0_i32_1 = arith.constant 0 : i32
    return %c0_i32, %c0_i32_0 : i32, i32
  }
  func.func @transform_4(%arg0: i32, %arg1: i32) -> (i32, i32) {
    %c0_i32 = arith.constant 0 : i32
    %c0_i32_0 = arith.constant 0 : i32
    return %arg0, %c0_i32 : i32, i32
  }
}

</mosaic_0001>

<llo_original>
// kernel: tpu_custom_call.1
$region0: #{tpu_custom_call.1}
  #allocation0 [shape = 'u32[]', space=smem, size = 0x4, offset = 0x4, fixed_abs, tag = 'smem constant byte address 0x4 - core index']
  #allocation1 [shape = 'u32[144,128]{1,0:T(1,128)}', space=vmem, size = 0x12000, scoped, tag = 'internal scratch']
  #allocation2 [shape = 'f32[128,128]{1,0:T(8,128)}', space=vmem, size = 0x10000, scoped, tag = 'scratch operand']
  %s0 = inlined_call_operand.hbm [shape: bf16[256,256], index: 0, kind: input, shape index: {}]
  %s1 = inlined_call_operand.hbm [shape: bf16[256,128], index: 1, kind: input, shape index: {}]
  %s2 = inlined_call_operand.hbm [shape: bf16[256,128], index: 2, kind: input, shape index: {}]
  %s3 = inlined_call_operand.hbm [shape: f32[128,128], index: 3, kind: input, shape index: {}]
  %s4 = inlined_call_operand.hbm [shape: f32[256,128], index: 4, kind: output, shape index: {}]
  %s5 = sld [smem:[#allocation0]]
  $region73: #{tpu_custom_call.1} parent=0
    _
  %s7 = ssub.s32 1, %s5
  %s8 = scalar_select 0, %s7, %s5
  $region1: #{tpu_custom_call.1} parent=0
    #allocation3 [shape = 'u8[65536]{0}', space=vmem, size = 0x10000, scoped, tag = 'input window, operand 0']
    #allocation4 [shape = 's32[2]{0}', space=sflag, size = 0x8, scoped, tag = 'scoped memory for tpu_custom_call.1']
    #allocation5 [shape = 's32[2]{0}', space=sflag, size = 0x8, scoped, tag = 'scoped memory for tpu_custom_call.1']
    #allocation6 [shape = 'u8[65536]{0}', space=vmem, size = 0x10000, scoped, tag = 'input window, operand 1']
    #allocation7 [shape = 's32[2]{0}', space=sflag, size = 0x8, scoped, tag = 'scoped memory for tpu_custom_call.1']
    #allocation8 [shape = 'u8[65536]{0}', space=vmem, size = 0x10000, scoped, tag = 'input window, operand 2']
    #allocation9 [shape = 'u8[65536]{0}', space=vmem, size = 0x10000, scoped, tag = 'input window, operand 3, single buffered']
    #allocation10 [shape = 's32[1]{0}', space=sflag, size = 0x4, scoped, tag = 'scoped memory for tpu_custom_call.1']
    #allocation11 [shape = 'u8[131072]{0}', space=vmem, size = 0x20000, scoped, tag = 'output window, operand 0']
    %9 = vsyncpa [#allocation4], 0
    %s10 = scalar_lea.sflag [#allocation4], 1
    %11 = vsyncpa %s10, 0
    %12 = vsyncpa [#allocation7], 0
    %s13 = scalar_lea.sflag [#allocation7], 1
    %14 = vsyncpa %s13, 0
    %15 = vsyncpa [#allocation10], 0
    %16 = vsyncpa [#allocation5], 0
    %s17 = scalar_lea.sflag [#allocation5], 1
    %18 = vsyncpa %s17, 0
    loop: start=0, step=1, limit=6
    $region2: #{tpu_custom_call.1} parent=1 // loop_pre_header
      _
    $region3: #{tpu_custom_call.1} parent=1 // loop_header
      %s20 = sphi 0, %s24
      %p21 = scmp.ge.s32.totalorder %s20, 6
      %s27 = sphi 0, %s39
      %s28 = sphi 0, %s35
      %s29 = sphi 0, %s27
      %s30 = sphi 0, %s28
      %s31 = sphi 0, %s29
      %s32 = sphi 0, %s30
      %s44 = sphi 0, %s46
      %s47 = sphi 0, %s44
      %s48 = sphi 0, %s47
      %s64 = sphi 0, %s48
      %s70 = sphi 0, %s72
      %s73 = sphi 0, %s70
      %s74 = sphi 0, %s73
      %s90 = sphi 0, %s74
      %s96 = sphi 0, %s98
      %s99 = sphi 0, %s96
      %s100 = sphi 0, %s99
      %s116 = sphi 0, %s100
      %s120 = sphi 0, %s120
      %s122 = sphi 0, %s120
      %s123 = sphi 0, %s122
      %s137 = sphi 0, %s123
      %s143 = sphi 0, %s145
      %s146 = sphi 0, %s143
      %s147 = sphi 0, %s146
      %s163 = sphi 0, %s147
    $region4: #{tpu_custom_call.1} parent=1 // loop_header_branch
      %23 = sbr.rel (%p21) target = $region8
    $region5: #{tpu_custom_call.1} parent=1 // loop_body
      %s25 = ssub.s32 %s20, 1
      %s26 = ssub.s32 %s20, 2
      %s33 = sadd.s32 1, %s28
      %p34 = scmp.ge.s32.totalorder %s33, 2
      %s35 = scalar_select %p34, 0, %s33
      %s36 = sadd.s32 1, %s27
      %s37 = scalar_select %p34, %s36, %s27
      %p38 = scmp.ge.s32.totalorder %s37, 2
      %s39 = scalar_select %p38, 0, %s37
      %s40 = ssub.s32 %s27, %s39
      %s41 = ssub.s32 %s28, %s35
      %s42 = sor.u32 %s40, %s41
      %p43 = scmp.eq.s32.totalorder %s42, 0
      %s45 = sadd.s32 %s44, 1
      %s46 = scalar_select %p43, %s44, %s45
      %p49 = pneg %p43
      %p50 = scmp.eq.s32.totalorder %s20, 3
      %p51 = por %p49, %p50
      %p52 = scmp.ne.s32.totalorder %s44, %s47
      %p53 = scmp.eq.s32.totalorder %s20, 0
      %p54 = por %p52, %p53
      %p55 = scmp.ne.s32.totalorder %s44, %s47
      %p56 = scmp.eq.s32.totalorder %s25, 3
      %p57 = por %p55, %p56
      %p58 = scmp.ne.s32.totalorder %s47, %s48
      %p59 = scmp.eq.s32.totalorder %s25, 0
      %p60 = por %p58, %p59
      %p61 = scmp.ne.s32.totalorder %s47, %s48
      %p62 = scmp.eq.s32.totalorder %s26, 3
      %p63 = por %p61, %p62
      %p65 = scmp.ne.s32.totalorder %s48, %s64
      %p66 = scmp.eq.s32.totalorder %s26, 0
      %p67 = por %p65, %p66
      %s68 = ssub.s32 %s28, %s35
      %p69 = scmp.eq.s32.totalorder %s68, 0
      %s71 = sadd.s32 %s70, 1
      %s72 = scalar_select %p69, %s70, %s71
      %p75 = pneg %p69
      %p76 = scmp.eq.s32.totalorder %s20, 3
      %p77 = por %p75, %p76
      %p78 = scmp.ne.s32.totalorder %s70, %s73
      %p79 = scmp.eq.s32.totalorder %s20, 0
      %p80 = por %p78, %p79
      %p81 = scmp.ne.s32.totalorder %s70, %s73
      %p82 = scmp.eq.s32.totalorder %s25, 3
      %p83 = por %p81, %p82
      %p84 = scmp.ne.s32.totalorder %s73, %s74
      %p85 = scmp.eq.s32.totalorder %s25, 0
      %p86 = por %p84, %p85
      %p87 = scmp.ne.s32.totalorder %s73, %s74
      %p88 = scmp.eq.s32.totalorder %s26, 3
      %p89 = por %p87, %p88
      %p91 = scmp.ne.s32.totalorder %s74, %s90
      %p92 = scmp.eq.s32.totalorder %s26, 0
      %p93 = por %p91, %p92
      %s94 = ssub.s32 %s27, %s39
      %p95 = scmp.eq.s32.totalorder %s94, 0
      %s97 = sadd.s32 %s96, 1
      %s98 = scalar_select %p95, %s96, %s97
      %p101 = pneg %p95
      %p102 = scmp.eq.s32.totalorder %s20, 3
      %p103 = por %p101, %p102
      %p104 = scmp.ne.s32.totalorder %s96, %s99
      %p105 = scmp.eq.s32.totalorder %s20, 0
      %p106 = por %p104, %p105
      %p107 = scmp.ne.s32.totalorder %s96, %s99
      %p108 = scmp.eq.s32.totalorder %s25, 3
      %p109 = por %p107, %p108
      %p110 = scmp.ne.s32.totalorder %s99, %s100
      %p111 = scmp.eq.s32.totalorder %s25, 0
      %p112 = por %p110, %p111
      %p113 = scmp.ne.s32.totalorder %s99, %s100
      %p114 = scmp.eq.s32.totalorder %s26, 3
      %p115 = por %p113, %p114
      %p117 = scmp.ne.s32.totalorder %s100, %s116
      %p118 = scmp.eq.s32.totalorder %s26, 0
      %p119 = por %p117, %p118
      %s121 = sadd.s32 %s120, 1
      %p124 = scmp.eq.s32.totalorder %s20, 3
      %p125 = scmp.ne.s32.totalorder %s120, %s122
      %p126 = scmp.eq.s32.totalorder %s20, 0
      %p127 = por %p125, %p126
      %p128 = scmp.ne.s32.totalorder %s120, %s122
      %p129 = scmp.eq.s32.totalorder %s25, 3
      %p130 = por %p128, %p129
      %p131 = scmp.ne.s32.totalorder %s122, %s123
      %p132 = scmp.eq.s32.totalorder %s25, 0
      %p133 = por %p131, %p132
      %p134 = scmp.ne.s32.totalorder %s122, %s123
      %p135 = scmp.eq.s32.totalorder %s26, 3
      %p136 = por %p134, %p135
      %p138 = scmp.ne.s32.totalorder %s123, %s137
      %p139 = scmp.eq.s32.totalorder %s26, 0
      %p140 = por %p138, %p139
      %s141 = ssub.s32 %s27, %s39
      %p142 = scmp.eq.s32.totalorder %s141, 0
      %s144 = sadd.s32 %s143, 1
      %s145 = scalar_select %p142, %s143, %s144
      %p148 = pneg %p142
      %p149 = scmp.eq.s32.totalorder %s20, 3
      %p150 = por %p148, %p149
      %p151 = scmp.ne.s32.totalorder %s143, %s146
      %p152 = scmp.eq.s32.totalorder %s20, 0
      %p153 = por %p151, %p152
      %p154 = scmp.ne.s32.totalorder %s143, %s146
      %p155 = scmp.eq.s32.totalorder %s25, 3
      %p156 = por %p154, %p155
      %p157 = scmp.ne.s32.totalorder %s146, %s147
      %p158 = scmp.eq.s32.totalorder %s25, 0
      %p159 = por %p157, %p158
      %p160 = scmp.ne.s32.totalorder %s146, %s147
      %p161 = scmp.eq.s32.totalorder %s26, 3
      %p162 = por %p160, %p161
      %p164 = scmp.ne.s32.totalorder %s147, %s163
      %p165 = scmp.eq.s32.totalorder %s26, 0
      %p166 = por %p164, %p165
      %p167 = scmp.le.s32.totalorder 1, %s20
      %p168 = scmp.lt.s32.totalorder %s20, 5
      %p169 = pnand %p167, %p168
      %p170 = pneg %p169
      // Predicated region
      $region9: #{tpu_custom_call.1} parent=5 // pred_check
        _
      $region10: #{tpu_custom_call.1} parent=5 // pred_check_branch
        %172 = sbr.rel (%p169) target = $region12
      $region11: #{tpu_custom_call.1} parent=5 // pred_region
        %s173 = ssub.s32 %s20, 1
        // Predicated region
        $region13: #{tpu_custom_call.1} parent=11 // pred_check
          %p174 = pneg %p133
        $region14: #{tpu_custom_call.1} parent=11 // pred_check_branch
          %176 = sbr.rel (%p174) target = $region16
        $region15: #{tpu_custom_call.1} parent=11 // pred_region
          %s178 = ssub.s32 2048, 2048
          %179 = vsyncadd [#allocation10], %s178
          %s180 = sshll.u32 [#allocation9], 4
          %s181 = int_to_ptr.vmem [resolvable:$true] %s180
          %186 = dma.hbm_to_vmem [thread:$0]  %s3, 2048, %s181, [#allocation10], 128, 128, 8
        $region16: #{tpu_custom_call.1} parent=11 // pred_fallthru
          _
      $region12: #{tpu_custom_call.1} parent=5 // pred_fallthru
        _
      %p187 = scmp.lt.s32.totalorder %s20, 4
      // Predicated region
      $region17: #{tpu_custom_call.1} parent=5 // pred_check
        %p188 = pneg %p187
      $region18: #{tpu_custom_call.1} parent=5 // pred_check_branch
        %190 = sbr.rel (%p188) target = $region20
      $region19: #{tpu_custom_call.1} parent=5 // pred_region
        // Predicated region
        $region21: #{tpu_custom_call.1} parent=19 // pred_check
          %p191 = pneg %p54
        $region22: #{tpu_custom_call.1} parent=19 // pred_check_branch
          %193 = sbr.rel (%p191) target = $region24
        $region23: #{tpu_custom_call.1} parent=19 // pred_region
          %s194 = sand.u32 %s44, 1
          %s195 = scalar_lea.sflag [#allocation4], %s194
          %s196 = sand.u32 %s44, 1
          %s197 = smul.addr %s196, 64
          %s198 = scalar_lea.vmem [#allocation3], %s197
          %s199 = smul.u32 16, %s27
          %s201 = ssub.s32 1024, 1024
          %202 = vsyncadd %s195, %s201
          %s203 = smul.addr %s199, 2
          %s204 = sadd.s32 %s28, %s203
          %s205 = smul.addr %s204, 64
          %s206 = scalar_lea.hbm %s0, %s205
          %s207 = sshll.u32 %s198, 4
          %s208 = int_to_ptr.vmem [resolvable:$true] %s207
          %213 = dma.hbm_to_vmem [thread:$0]  %s206, 1024, %s208, %s195, 128, 64, 4
        $region24: #{tpu_custom_call.1} parent=19 // pred_fallthru
          _
        // Predicated region
        $region25: #{tpu_custom_call.1} parent=19 // pred_check
          %p214 = pneg %p80
        $region26: #{tpu_custom_call.1} parent=19 // pred_check_branch
          %216 = sbr.rel (%p214) target = $region28
        $region27: #{tpu_custom_call.1} parent=19 // pred_region
          %s217 = sand.u32 %s20, 1
          %s218 = scalar_lea.sflag [#allocation7], %s217
          %s219 = sand.u32 %s70, 1
          %s220 = smul.addr %s219, 64
          %s221 = scalar_lea.vmem [#allocation6], %s220
          %s222 = smul.u32 16, %s28
          %s224 = ssub.s32 1024, 1024
          %225 = vsyncadd %s218, %s224
          %s226 = smul.addr %s222, 64
          %s227 = scalar_lea.hbm %s1, %s226
          %s228 = sshll.u32 %s221, 4
          %s229 = int_to_ptr.vmem [resolvable:$true] %s228
          %234 = dma.hbm_to_vmem [thread:$0]  %s227, 1024, %s229, %s218, 64, 64, 4
        $region28: #{tpu_custom_call.1} parent=19 // pred_fallthru
          _
        // Predicated region
        $region29: #{tpu_custom_call.1} parent=19 // pred_check
          %p235 = pneg %p106
        $region30: #{tpu_custom_call.1} parent=19 // pred_check_branch
          %237 = sbr.rel (%p235) target = $region32
        $region31: #{tpu_custom_call.1} parent=19 // pred_region
          %s238 = sand.u32 %s20, 1
          %s239 = scalar_lea.sflag [#allocation7], %s238
          %s240 = sand.u32 %s96, 1
          %s241 = smul.addr %s240, 64
          %s242 = scalar_lea.vmem [#allocation8], %s241
          %s243 = smul.u32 16, %s27
          %s245 = ssub.s32 1024, 1024
          %246 = vsyncadd %s239, %s245
          %s247 = smul.addr %s243, 64
          %s248 = scalar_lea.hbm %s2, %s247
          %s249 = sshll.u32 %s242, 4
          %s250 = int_to_ptr.vmem [resolvable:$true] %s249
          %255 = dma.hbm_to_vmem [thread:$0]  %s248, 1024, %s250, %s239, 64, 64, 4
        $region32: #{tpu_custom_call.1} parent=19 // pred_fallthru
          _
      $region20: #{tpu_custom_call.1} parent=5 // pred_fallthru
        _
      %p256 = scmp.le.s32.totalorder 1, %s20
      %p257 = scmp.lt.s32.totalorder %s20, 5
      %p258 = pnand %p256, %p257
      %p259 = pneg %p258
      // Predicated region
      $region33: #{tpu_custom_call.1} parent=5 // pred_check
        _
      $region34: #{tpu_custom_call.1} parent=5 // pred_check_branch
        %261 = sbr.rel (%p258) target = $region36
      $region35: #{tpu_custom_call.1} parent=5 // pred_region
        %s262 = ssub.s32 %s20, 1
        %s263 = sand.u32 %s47, 1
        %s264 = scalar_lea.sflag [#allocation4], %s263
        %s265 = sand.u32 %s47, 1
        %s266 = smul.addr %s265, 64
        %s267 = scalar_lea.vmem [#allocation3], %s266
        // Predicated region
        $region37: #{tpu_custom_call.1} parent=35 // pred_check
          %p268 = pneg %p60
        $region38: #{tpu_custom_call.1} parent=35 // pred_check_branch
          %270 = sbr.rel (%p268) target = $region40
        $region39: #{tpu_custom_call.1} parent=35 // pred_region
          %271 = dma.done %s264, 1024
        $region40: #{tpu_custom_call.1} parent=35 // pred_fallthru
          _
        %s272 = sand.u32 %s25, 1
        %s273 = scalar_lea.sflag [#allocation7], %s272
        %s274 = sand.u32 %s73, 1
        %s275 = smul.addr %s274, 64
        %s276 = scalar_lea.vmem [#allocation6], %s275
        // Predicated region
        $region41: #{tpu_custom_call.1} parent=35 // pred_check
          %p277 = pneg %p86
        $region42: #{tpu_custom_call.1} parent=35 // pred_check_branch
          %279 = sbr.rel (%p277) target = $region44
        $region43: #{tpu_custom_call.1} parent=35 // pred_region
          %280 = dma.done %s273, 1024
        $region44: #{tpu_custom_call.1} parent=35 // pred_fallthru
          _
        %s281 = sand.u32 %s25, 1
        %s282 = scalar_lea.sflag [#allocation7], %s281
        %s283 = sand.u32 %s99, 1
        %s284 = smul.addr %s283, 64
        %s285 = scalar_lea.vmem [#allocation8], %s284
        // Predicated region
        $region45: #{tpu_custom_call.1} parent=35 // pred_check
          %p286 = pneg %p112
        $region46: #{tpu_custom_call.1} parent=35 // pred_check_branch
          %288 = sbr.rel (%p286) target = $region48
        $region47: #{tpu_custom_call.1} parent=35 // pred_region
          %289 = dma.done %s282, 1024
        $region48: #{tpu_custom_call.1} parent=35 // pred_fallthru
          _
        // Predicated region
        $region49: #{tpu_custom_call.1} parent=35 // pred_check
          %p290 = pneg %p133
        $region50: #{tpu_custom_call.1} parent=35 // pred_check_branch
          %292 = sbr.rel (%p290) target = $region52
        $region51: #{tpu_custom_call.1} parent=35 // pred_region
          %293 = dma.done [#allocation10], 2048
        $region52: #{tpu_custom_call.1} parent=35 // pred_fallthru
          _
        %s294 = sand.u32 %s47, 1
        %s295 = scalar_lea.sflag [#allocation4], %s294
        %s296 = sand.u32 %s47, 1
        %s297 = smul.addr %s296, 64
        %s298 = scalar_lea.vmem [#allocation3], %s297
        %p299 = pneg %p60
        %p300 = pneg %p57
        %s301 = sand.u32 %s25, 1
        %s302 = scalar_lea.sflag [#allocation7], %s301
        %s303 = sand.u32 %s73, 1
        %s304 = smul.addr %s303, 64
        %s305 = scalar_lea.vmem [#allocation6], %s304
        %p306 = pneg %p86
        %p307 = pneg %p83
        %s308 = sand.u32 %s25, 1
        %s309 = scalar_lea.sflag [#allocation7], %s308
        %s310 = sand.u32 %s99, 1
        %s311 = smul.addr %s310, 64
        %s312 = scalar_lea.vmem [#allocation8], %s311
        %p313 = pneg %p112
        %p314 = pneg %p109
        %p315 = pneg %p133
        %p316 = pneg %p130
        %p317 = pneg %p159
        %p318 = pneg %p156
        %s319 = sand.u32 %s146, 1
        %s320 = scalar_lea.sflag [#allocation5], %s319
        %s321 = sand.u32 %s146, 1
        %s322 = smul.addr %s321, 128
        %s323 = scalar_lea.vmem [#allocation11], %s322
        %s324 = smul.u32 16, %s29
        %s325 = smul.u32 16, %s30
        %s326 = smul.u32 16, %s29
        %s327 = smul.u32 16, %s29
        %p329 = scmp.eq.s32.totalorder %s30, 0
        // Predicated region
        $region53: #{tpu_custom_call.1} parent=35 // pred_check
          %p330 = pneg %p329
        $region54: #{tpu_custom_call.1} parent=35 // pred_check_branch
          %332 = sbr.rel (%p330) target = $region56
        $region55: #{tpu_custom_call.1} parent=35 // pred_region
          %333 = vst [vmem:[#allocation2] sm:$0xff] 0.0
          %334 = vst [vmem:[#allocation2 + $0x8] sm:$0xff] 0.0
          %335 = vst [vmem:[#allocation2 + $0x10] sm:$0xff] 0.0
          %336 = vst [vmem:[#allocation2 + $0x18] sm:$0xff] 0.0
          %337 = vst [vmem:[#allocation2 + $0x20] sm:$0xff] 0.0
          %338 = vst [vmem:[#allocation2 + $0x28] sm:$0xff] 0.0
          %339 = vst [vmem:[#allocation2 + $0x30] sm:$0xff] 0.0
          %340 = vst [vmem:[#allocation2 + $0x38] sm:$0xff] 0.0
          %341 = vst [vmem:[#allocation2 + $0x40] sm:$0xff] 0.0
          %342 = vst [vmem:[#allocation2 + $0x48] sm:$0xff] 0.0
          %343 = vst [vmem:[#allocation2 + $0x50] sm:$0xff] 0.0
          %344 = vst [vmem:[#allocation2 + $0x58] sm:$0xff] 0.0
          %345 = vst [vmem:[#allocation2 + $0x60] sm:$0xff] 0.0
          %346 = vst [vmem:[#allocation2 + $0x68] sm:$0xff] 0.0
          %347 = vst [vmem:[#allocation2 + $0x70] sm:$0xff] 0.0
          %348 = vst [vmem:[#allocation2 + $0x78] sm:$0xff] 0.0
        $region56: #{tpu_custom_call.1} parent=35 // pred_fallthru
          _
        %v349 = vld [vmem:[#allocation2] sm:$0xff]
        %v350 = vld [vmem:[#allocation2 + $0x8] sm:$0xff]
        %v351 = vld [vmem:[#allocation2 + $0x10] sm:$0xff]
        %v352 = vld [vmem:[#allocation2 + $0x18] sm:$0xff]
        %v353 = vld [vmem:[#allocation2 + $0x20] sm:$0xff]
        %v354 = vld [vmem:[#allocation2 + $0x28] sm:$0xff]
        %v355 = vld [vmem:[#allocation2 + $0x30] sm:$0xff]
        %v356 = vld [vmem:[#allocation2 + $0x38] sm:$0xff]
        %v357 = vld [vmem:[#allocation2 + $0x40] sm:$0xff]
        %v358 = vld [vmem:[#allocation2 + $0x48] sm:$0xff]
        %v359 = vld [vmem:[#allocation2 + $0x50] sm:$0xff]
        %v360 = vld [vmem:[#allocation2 + $0x58] sm:$0xff]
        %v361 = vld [vmem:[#allocation2 + $0x60] sm:$0xff]
        %v362 = vld [vmem:[#allocation2 + $0x68] sm:$0xff]
        %v363 = vld [vmem:[#allocation2 + $0x70] sm:$0xff]
        %v364 = vld [vmem:[#allocation2 + $0x78] sm:$0xff]
        %v365 = vld [vmem:[%s267] sm:$0xf]
        %v366 = vld [vmem:[%s267 + $0x4] sm:$0xf]
        %v367 = vld [vmem:[%s267 + $0x8] sm:$0xf]
        %v368 = vld [vmem:[%s267 + $0xc] sm:$0xf]
        %v369 = vld [vmem:[%s267 + $0x10] sm:$0xf]
        %v370 = vld [vmem:[%s267 + $0x14] sm:$0xf]
        %v371 = vld [vmem:[%s267 + $0x18] sm:$0xf]
        %v372 = vld [vmem:[%s267 + $0x1c] sm:$0xf]
        %v373 = vld [vmem:[%s267 + $0x20] sm:$0xf]
        %v374 = vld [vmem:[%s267 + $0x24] sm:$0xf]
        %v375 = vld [vmem:[%s267 + $0x28] sm:$0xf]
        %v376 = vld [vmem:[%s267 + $0x2c] sm:$0xf]
        %v377 = vld [vmem:[%s267 + $0x30] sm:$0xf]
        %v378 = vld [vmem:[%s267 + $0x34] sm:$0xf]
        %v379 = vld [vmem:[%s267 + $0x38] sm:$0xf]
        %v380 = vld [vmem:[%s267 + $0x3c] sm:$0xf]
        %v381 = vld [vmem:[%s276] sm:$0xf]
        %v382 = vld [vmem:[%s276 + $0x4] sm:$0xf]
        %v383 = vld [vmem:[%s276 + $0x8] sm:$0xf]
        %v384 = vld [vmem:[%s276 + $0xc] sm:$0xf]
        %v385 = vld [vmem:[%s276 + $0x10] sm:$0xf]
        %v386 = vld [vmem:[%s276 + $0x14] sm:$0xf]
        %v387 = vld [vmem:[%s276 + $0x18] sm:$0xf]
        %v388 = vld [vmem:[%s276 + $0x1c] sm:$0xf]
        %v389 = vld [vmem:[%s276 + $0x20] sm:$0xf]
        %v390 = vld [vmem:[%s276 + $0x24] sm:$0xf]
        %v391 = vld [vmem:[%s276 + $0x28] sm:$0xf]
        %v392 = vld [vmem:[%s276 + $0x2c] sm:$0xf]
        %v393 = vld [vmem:[%s276 + $0x30] sm:$0xf]
        %v394 = vld [vmem:[%s276 + $0x34] sm:$0xf]
        %v395 = vld [vmem:[%s276 + $0x38] sm:$0xf]
        %v396 = vld [vmem:[%s276 + $0x3c] sm:$0xf]
        %v413 = vunpack.c.l.b16 %v365
        %v414 = vunpack.c.l.b16 %v366
        %v415 = vunpack.c.l.b16 %v367
        %v416 = vunpack.c.l.b16 %v368
        %v417 = vunpack.c.l.b16 %v369
        %v418 = vunpack.c.l.b16 %v370
        %v419 = vunpack.c.l.b16 %v371
        %v420 = vunpack.c.l.b16 %v372
        %v421 = vunpack.c.l.b16 %v373
        %v422 = vunpack.c.l.b16 %v374
        %v423 = vunpack.c.l.b16 %v375
        %v424 = vunpack.c.l.b16 %v376
        %v425 = vunpack.c.l.b16 %v377
        %v426 = vunpack.c.l.b16 %v378
        %v427 = vunpack.c.l.b16 %v379
        %v428 = vunpack.c.l.b16 %v380
        %v429 = vpack.c.b16 %v414, %v413
        %v430 = vpack.c.b16 %v416, %v415
        %v431 = vpack.c.b16 %v418, %v417
        %v432 = vpack.c.b16 %v420, %v419
        %v433 = vpack.c.b16 %v422, %v421
        %v434 = vpack.c.b16 %v424, %v423
        %v435 = vpack.c.b16 %v426, %v425
        %v436 = vpack.c.b16 %v428, %v427
        %v461 = vunpack.c.l.b16 %v381
        %v462 = vunpack.c.l.b16 %v382
        %v463 = vunpack.c.l.b16 %v383
        %v464 = vunpack.c.l.b16 %v384
        %v465 = vunpack.c.l.b16 %v385
        %v466 = vunpack.c.l.b16 %v386
        %v467 = vunpack.c.l.b16 %v387
        %v468 = vunpack.c.l.b16 %v388
        %v469 = vunpack.c.l.b16 %v389
        %v470 = vunpack.c.l.b16 %v390
        %v471 = vunpack.c.l.b16 %v391
        %v472 = vunpack.c.l.b16 %v392
        %v473 = vunpack.c.l.b16 %v393
        %v474 = vunpack.c.l.b16 %v394
        %v475 = vunpack.c.l.b16 %v395
        %v476 = vunpack.c.l.b16 %v396
        %v477 = vpack.c.b16 %v462, %v461
        %v478 = vpack.c.b16 %v464, %v463
        %v479 = vpack.c.b16 %v466, %v465
        %v480 = vpack.c.b16 %v468, %v467
        %v481 = vpack.c.b16 %v470, %v469
        %v482 = vpack.c.b16 %v472, %v471
        %v483 = vpack.c.b16 %v474, %v473
        %v484 = vpack.c.b16 %v476, %v475
        %493 = vmatprep.subr.bf16.mxu0 0
        %494 = vmatpush1.bf16.msra.mxu0 %v484
        %495 = vmatprep.subr.bf16.mxu0 0
        %496 = vmatpush1.bf16.msra.mxu0 %v483
        %497 = vmatprep.subr.bf16.mxu0 0
        %498 = vmatpush1.bf16.msra.mxu0 %v482
        %499 = vmatprep.subr.bf16.mxu0 0
        %500 = vmatpush1.bf16.msra.mxu0 %v481
        %501 = vmatprep.subr.bf16.mxu0 0
        %502 = vmatpush1.bf16.msra.mxu0 %v480
        %503 = vmatprep.subr.bf16.mxu0 0
        %504 = vmatpush1.bf16.msra.mxu0 %v479
        %505 = vmatprep.subr.bf16.mxu0 0
        %506 = vmatpush1.bf16.msra.mxu0 %v478
        %507 = vmatprep.subr.bf16.mxu0 0
        %508 = vmatpush1.bf16.msra.mxu0 %v477
        %509 = vmatprep.subr.bf16.mxu0 0
        %510 = vmatpush2.bf16.msra.mxu0 0
        %511 = vmatprep.subr.bf16.mxu0 0
        %512 = vmatpush2.bf16.msra.mxu0 0
        %513 = vmatprep.subr.bf16.mxu0 0
        %514 = vmatpush2.bf16.msra.mxu0 0
        %515 = vmatprep.subr.bf16.mxu0 0
        %516 = vmatpush2.bf16.msra.mxu0 0
        %517 = vmatprep.subr.bf16.mxu0 0
        %518 = vmatpush2.bf16.msra.mxu0 0
        %519 = vmatprep.subr.bf16.mxu0 0
        %520 = vmatpush2.bf16.msra.mxu0 0
        %521 = vmatprep.subr.bf16.mxu0 0
        %522 = vmatpush2.bf16.msra.mxu0 0
        %523 = vmatprep.subr.bf16.mxu0 0
        %524 = vmatpush2.bf16.msra.mxu0 0
        %525 = vmatprep.mubr.bf16.mxu0 0
        %526 = vmatmul.mubr.bf16.gmra.mxu0 %v429
        %v527 = vpop.f32.mrf.mxu0
        %v528 = vadd.f32 0.0, %v527
        %v529 = vpop.f32.mrf.mxu0
        %v530 = vpop.f32.mrf.mxu0
        %v531 = vadd.f32 0.0, %v530
        %v532 = vpop.f32.mrf.mxu0
        %533 = vmatprep.mubr.bf16.mxu0 0
        %534 = vmatmul.mubr.bf16.gmra.mxu0 %v430
        %v535 = vpop.f32.mrf.mxu0
        %v536 = vadd.f32 0.0, %v535
        %v537 = vpop.f32.mrf.mxu0
        %v538 = vpop.f32.mrf.mxu0
        %v539 = vadd.f32 0.0, %v538
        %v540 = vpop.f32.mrf.mxu0
        %541 = vmatprep.mubr.bf16.mxu0 0
        %542 = vmatmul.mubr.bf16.gmra.mxu0 %v431
        %v543 = vpop.f32.mrf.mxu0
        %v544 = vadd.f32 0.0, %v543
        %v545 = vpop.f32.mrf.mxu0
        %v546 = vpop.f32.mrf.mxu0
        %v547 = vadd.f32 0.0, %v546
        %v548 = vpop.f32.mrf.mxu0
        %549 = vmatprep.mubr.bf16.mxu0 0
        %550 = vmatmul.mubr.bf16.gmra.mxu0 %v432
        %v551 = vpop.f32.mrf.mxu0
        %v552 = vadd.f32 0.0, %v551
        %v553 = vpop.f32.mrf.mxu0
        %v554 = vpop.f32.mrf.mxu0
        %v555 = vadd.f32 0.0, %v554
        %v556 = vpop.f32.mrf.mxu0
        %557 = vmatprep.mubr.bf16.mxu0 0
        %558 = vmatmul.mubr.bf16.gmra.mxu0 %v433
        %v559 = vpop.f32.mrf.mxu0
        %v560 = vadd.f32 0.0, %v559
        %v561 = vpop.f32.mrf.mxu0
        %v562 = vpop.f32.mrf.mxu0
        %v563 = vadd.f32 0.0, %v562
        %v564 = vpop.f32.mrf.mxu0
        %565 = vmatprep.mubr.bf16.mxu0 0
        %566 = vmatmul.mubr.bf16.gmra.mxu0 %v434
        %v567 = vpop.f32.mrf.mxu0
        %v568 = vadd.f32 0.0, %v567
        %v569 = vpop.f32.mrf.mxu0
        %v570 = vpop.f32.mrf.mxu0
        %v571 = vadd.f32 0.0, %v570
        %v572 = vpop.f32.mrf.mxu0
        %573 = vmatprep.mubr.bf16.mxu0 0
        %574 = vmatmul.mubr.bf16.gmra.mxu0 %v435
        %v575 = vpop.f32.mrf.mxu0
        %v576 = vadd.f32 0.0, %v575
        %v577 = vpop.f32.mrf.mxu0
        %v578 = vpop.f32.mrf.mxu0
        %v579 = vadd.f32 0.0, %v578
        %v580 = vpop.f32.mrf.mxu0
        %581 = vmatprep.mubr.bf16.mxu0 0
        %582 = vmatmul.mubr.bf16.gmra.mxu0 %v436
        %v583 = vpop.f32.mrf.mxu0
        %v584 = vadd.f32 0.0, %v583
        %v585 = vpop.f32.mrf.mxu0
        %v586 = vpop.f32.mrf.mxu0
        %v587 = vadd.f32 0.0, %v586
        %v588 = vpop.f32.mrf.mxu0
        %589 = vdwg.mxu0
        %v590 = vadd.f32 %v349, %v528
        %v591 = vadd.f32 %v350, %v531
        %v592 = vadd.f32 %v351, %v536
        %v593 = vadd.f32 %v352, %v539
        %v594 = vadd.f32 %v353, %v544
        %v595 = vadd.f32 %v354, %v547
        %v596 = vadd.f32 %v355, %v552
        %v597 = vadd.f32 %v356, %v555
        %v598 = vadd.f32 %v357, %v560
        %v599 = vadd.f32 %v358, %v563
        %v600 = vadd.f32 %v359, %v568
        %v601 = vadd.f32 %v360, %v571
        %v602 = vadd.f32 %v361, %v576
        %v603 = vadd.f32 %v362, %v579
        %v604 = vadd.f32 %v363, %v584
        %v605 = vadd.f32 %v364, %v587
        %606 = vst [vmem:[#allocation2] sm:$0xff] %v590
        %607 = vst [vmem:[#allocation2 + $0x8] sm:$0xff] %v591
        %608 = vst [vmem:[#allocation2 + $0x10] sm:$0xff] %v592
        %609 = vst [vmem:[#allocation2 + $0x18] sm:$0xff] %v593
        %610 = vst [vmem:[#allocation2 + $0x20] sm:$0xff] %v594
        %611 = vst [vmem:[#allocation2 + $0x28] sm:$0xff] %v595
        %612 = vst [vmem:[#allocation2 + $0x30] sm:$0xff] %v596
        %613 = vst [vmem:[#allocation2 + $0x38] sm:$0xff] %v597
        %614 = vst [vmem:[#allocation2 + $0x40] sm:$0xff] %v598
        %615 = vst [vmem:[#allocation2 + $0x48] sm:$0xff] %v599
        %616 = vst [vmem:[#allocation2 + $0x50] sm:$0xff] %v600
        %617 = vst [vmem:[#allocation2 + $0x58] sm:$0xff] %v601
        %618 = vst [vmem:[#allocation2 + $0x60] sm:$0xff] %v602
        %619 = vst [vmem:[#allocation2 + $0x68] sm:$0xff] %v603
        %620 = vst [vmem:[#allocation2 + $0x70] sm:$0xff] %v604
        %621 = vst [vmem:[#allocation2 + $0x78] sm:$0xff] %v605
        %p622 = scmp.eq.s32.totalorder %s30, 1
        // Predicated region
        $region57: #{tpu_custom_call.1} parent=35 // pred_check
          %p623 = pneg %p622
        $region58: #{tpu_custom_call.1} parent=35 // pred_check_branch
          %625 = sbr.rel (%p623) target = $region60
        $region59: #{tpu_custom_call.1} parent=35 // pred_region
          %v626 = vld [vmem:[#allocation2] sm:$0xff]
          %v627 = vld [vmem:[#allocation2 + $0x8] sm:$0xff]
          %v628 = vld [vmem:[#allocation2 + $0x10] sm:$0xff]
          %v629 = vld [vmem:[#allocation2 + $0x18] sm:$0xff]
          %v630 = vld [vmem:[#allocation2 + $0x20] sm:$0xff]
          %v631 = vld [vmem:[#allocation2 + $0x28] sm:$0xff]
          %v632 = vld [vmem:[#allocation2 + $0x30] sm:$0xff]
          %v633 = vld [vmem:[#allocation2 + $0x38] sm:$0xff]
          %v634 = vld [vmem:[#allocation2 + $0x40] sm:$0xff]
          %v635 = vld [vmem:[#allocation2 + $0x48] sm:$0xff]
          %v636 = vld [vmem:[#allocation2 + $0x50] sm:$0xff]
          %v637 = vld [vmem:[#allocation2 + $0x58] sm:$0xff]
          %v638 = vld [vmem:[#allocation2 + $0x60] sm:$0xff]
          %v639 = vld [vmem:[#allocation2 + $0x68] sm:$0xff]
          %v640 = vld [vmem:[#allocation2 + $0x70] sm:$0xff]
          %v641 = vld [vmem:[#allocation2 + $0x78] sm:$0xff]
          %v642 = vld [vmem:[#allocation9] sm:$0xff]
          %v643 = vld [vmem:[#allocation9 + $0x8] sm:$0xff]
          %v644 = vld [vmem:[#allocation9 + $0x10] sm:$0xff]
          %v645 = vld [vmem:[#allocation9 + $0x18] sm:$0xff]
          %v646 = vld [vmem:[#allocation9 + $0x20] sm:$0xff]
          %v647 = vld [vmem:[#allocation9 + $0x28] sm:$0xff]
          %v648 = vld [vmem:[#allocation9 + $0x30] sm:$0xff]
          %v649 = vld [vmem:[#allocation9 + $0x38] sm:$0xff]
          %v650 = vld [vmem:[#allocation9 + $0x40] sm:$0xff]
          %v651 = vld [vmem:[#allocation9 + $0x48] sm:$0xff]
          %v652 = vld [vmem:[#allocation9 + $0x50] sm:$0xff]
          %v653 = vld [vmem:[#allocation9 + $0x58] sm:$0xff]
          %v654 = vld [vmem:[#allocation9 + $0x60] sm:$0xff]
          %v655 = vld [vmem:[#allocation9 + $0x68] sm:$0xff]
          %v656 = vld [vmem:[#allocation9 + $0x70] sm:$0xff]
          %v657 = vld [vmem:[#allocation9 + $0x78] sm:$0xff]
          %658 = vmatprep.subr.mxu0 0.0
          %659 = vmatpush1.msra.mxu0 %v657
          %660 = vmatprep.subr.mxu0 0.0
          %661 = vmatpush1.msra.mxu0 %v656
          %662 = vmatprep.subr.mxu0 0.0
          %663 = vmatpush1.msra.mxu0 %v655
          %664 = vmatprep.subr.mxu0 0.0
          %665 = vmatpush1.msra.mxu0 %v654
          %666 = vmatprep.subr.mxu0 0.0
          %667 = vmatpush1.msra.mxu0 %v653
          %668 = vmatprep.subr.mxu0 0.0
          %669 = vmatpush1.msra.mxu0 %v652
          %670 = vmatprep.subr.mxu0 0.0
          %671 = vmatpush1.msra.mxu0 %v651
          %672 = vmatprep.subr.mxu0 0.0
          %673 = vmatpush1.msra.mxu0 %v650
          %674 = vmatprep.subr.mxu0 0.0
          %675 = vmatpush1.msra.mxu0 %v649
          %676 = vmatprep.subr.mxu0 0.0
          %677 = vmatpush1.msra.mxu0 %v648
          %678 = vmatprep.subr.mxu0 0.0
          %679 = vmatpush1.msra.mxu0 %v647
          %680 = vmatprep.subr.mxu0 0.0
          %681 = vmatpush1.msra.mxu0 %v646
          %682 = vmatprep.subr.mxu0 0.0
          %683 = vmatpush1.msra.mxu0 %v645
          %684 = vmatprep.subr.mxu0 0.0
          %685 = vmatpush1.msra.mxu0 %v644
          %686 = vmatprep.subr.mxu0 0.0
          %687 = vmatpush1.msra.mxu0 %v643
          %688 = vmatprep.subr.mxu0 0.0
          %689 = vmatpush1.msra.mxu0 %v642
          %690 = vmatprep.subr.mxu0 0.0
          %691 = vmatpush2.msra.mxu0 0.0
          %692 = vmatprep.subr.mxu0 0.0
          %693 = vmatpush2.msra.mxu0 0.0
          %694 = vmatprep.subr.mxu0 0.0
          %695 = vmatpush2.msra.mxu0 0.0
          %696 = vmatprep.subr.mxu0 0.0
          %697 = vmatpush2.msra.mxu0 0.0
          %698 = vmatprep.subr.mxu0 0.0
          %699 = vmatpush2.msra.mxu0 0.0
          %700 = vmatprep.subr.mxu0 0.0
          %701 = vmatpush2.msra.mxu0 0.0
          %702 = vmatprep.subr.mxu0 0.0
          %703 = vmatpush2.msra.mxu0 0.0
          %704 = vmatprep.subr.mxu0 0.0
          %705 = vmatpush2.msra.mxu0 0.0
          %706 = vmatprep.subr.mxu0 0.0
          %707 = vmatpush2.msra.mxu0 0.0
          %708 = vmatprep.subr.mxu0 0.0
          %709 = vmatpush2.msra.mxu0 0.0
          %710 = vmatprep.subr.mxu0 0.0
          %711 = vmatpush2.msra.mxu0 0.0
          %712 = vmatprep.subr.mxu0 0.0
          %713 = vmatpush2.msra.mxu0 0.0
          %714 = vmatprep.subr.mxu0 0.0
          %715 = vmatpush2.msra.mxu0 0.0
          %716 = vmatprep.subr.mxu0 0.0
          %717 = vmatpush2.msra.mxu0 0.0
          %718 = vmatprep.subr.mxu0 0.0
          %719 = vmatpush2.msra.mxu0 0.0
          %720 = vmatprep.subr.mxu0 0.0
          %721 = vmatpush2.msra.mxu0 0.0
          %722 = vmatprep.mubr.f32.mxu0 0.0
          %723 = vmatmul.mubr.f32.gmra.mxu0 %v626
          %v724 = vpop.f32.mrf.mxu0
          %v725 = vadd.f32 0.0, %v724
          %v726 = vpop.f32.mrf.mxu0
          %727 = vmatprep.mubr.f32.mxu0 0.0
          %728 = vmatmul.mubr.f32.gmra.mxu0 %v627
          %v729 = vpop.f32.mrf.mxu0
          %v730 = vadd.f32 0.0, %v729
          %v731 = vpop.f32.mrf.mxu0
          %732 = vmatprep.mubr.f32.mxu0 0.0
          %733 = vmatmul.mubr.f32.gmra.mxu0 %v628
          %v734 = vpop.f32.mrf.mxu0
          %v735 = vadd.f32 0.0, %v734
          %v736 = vpop.f32.mrf.mxu0
          %737 = vmatprep.mubr.f32.mxu0 0.0
          %738 = vmatmul.mubr.f32.gmra.mxu0 %v629
          %v739 = vpop.f32.mrf.mxu0
          %v740 = vadd.f32 0.0, %v739
          %v741 = vpop.f32.mrf.mxu0
          %742 = vmatprep.mubr.f32.mxu0 0.0
          %743 = vmatmul.mubr.f32.gmra.mxu0 %v630
          %v744 = vpop.f32.mrf.mxu0
          %v745 = vadd.f32 0.0, %v744
          %v746 = vpop.f32.mrf.mxu0
          %747 = vmatprep.mubr.f32.mxu0 0.0
          %748 = vmatmul.mubr.f32.gmra.mxu0 %v631
          %v749 = vpop.f32.mrf.mxu0
          %v750 = vadd.f32 0.0, %v749
          %v751 = vpop.f32.mrf.mxu0
          %752 = vmatprep.mubr.f32.mxu0 0.0
          %753 = vmatmul.mubr.f32.gmra.mxu0 %v632
          %v754 = vpop.f32.mrf.mxu0
          %v755 = vadd.f32 0.0, %v754
          %v756 = vpop.f32.mrf.mxu0
          %757 = vmatprep.mubr.f32.mxu0 0.0
          %758 = vmatmul.mubr.f32.gmra.mxu0 %v633
          %v759 = vpop.f32.mrf.mxu0
          %v760 = vadd.f32 0.0, %v759
          %v761 = vpop.f32.mrf.mxu0
          %762 = vmatprep.mubr.f32.mxu0 0.0
          %763 = vmatmul.mubr.f32.gmra.mxu0 %v634
          %v764 = vpop.f32.mrf.mxu0
          %v765 = vadd.f32 0.0, %v764
          %v766 = vpop.f32.mrf.mxu0
          %767 = vmatprep.mubr.f32.mxu0 0.0
          %768 = vmatmul.mubr.f32.gmra.mxu0 %v635
          %v769 = vpop.f32.mrf.mxu0
          %v770 = vadd.f32 0.0, %v769
          %v771 = vpop.f32.mrf.mxu0
          %772 = vmatprep.mubr.f32.mxu0 0.0
          %773 = vmatmul.mubr.f32.gmra.mxu0 %v636
          %v774 = vpop.f32.mrf.mxu0
          %v775 = vadd.f32 0.0, %v774
          %v776 = vpop.f32.mrf.mxu0
          %777 = vmatprep.mubr.f32.mxu0 0.0
          %778 = vmatmul.mubr.f32.gmra.mxu0 %v637
          %v779 = vpop.f32.mrf.mxu0
          %v780 = vadd.f32 0.0, %v779
          %v781 = vpop.f32.mrf.mxu0
          %782 = vmatprep.mubr.f32.mxu0 0.0
          %783 = vmatmul.mubr.f32.gmra.mxu0 %v638
          %v784 = vpop.f32.mrf.mxu0
          %v785 = vadd.f32 0.0, %v784
          %v786 = vpop.f32.mrf.mxu0
          %787 = vmatprep.mubr.f32.mxu0 0.0
          %788 = vmatmul.mubr.f32.gmra.mxu0 %v639
          %v789 = vpop.f32.mrf.mxu0
          %v790 = vadd.f32 0.0, %v789
          %v791 = vpop.f32.mrf.mxu0
          %792 = vmatprep.mubr.f32.mxu0 0.0
          %793 = vmatmul.mubr.f32.gmra.mxu0 %v640
          %v794 = vpop.f32.mrf.mxu0
          %v795 = vadd.f32 0.0, %v794
          %v796 = vpop.f32.mrf.mxu0
          %797 = vmatprep.mubr.f32.mxu0 0.0
          %798 = vmatmul.mubr.f32.gmra.mxu0 %v641
          %v799 = vpop.f32.mrf.mxu0
          %v800 = vadd.f32 0.0, %v799
          %v801 = vpop.f32.mrf.mxu0
          %802 = vdwg.mxu0
          %v803 = vtanh.pop %v725
          %v804 = vtanh.pop %v730
          %v805 = vtanh.pop %v735
          %v806 = vtanh.pop %v740
          %v807 = vtanh.pop %v745
          %v808 = vtanh.pop %v750
          %v809 = vtanh.pop %v755
          %v810 = vtanh.pop %v760
          %v811 = vtanh.pop %v765
          %v812 = vtanh.pop %v770
          %v813 = vtanh.pop %v775
          %v814 = vtanh.pop %v780
          %v815 = vtanh.pop %v785
          %v816 = vtanh.pop %v790
          %v817 = vtanh.pop %v795
          %v818 = vtanh.pop %v800
          %v819 = vld [vmem:[%s285] sm:$0xf]
          %v820 = vld [vmem:[%s285 + $0x4] sm:$0xf]
          %v821 = vld [vmem:[%s285 + $0x8] sm:$0xf]
          %v822 = vld [vmem:[%s285 + $0xc] sm:$0xf]
          %v823 = vld [vmem:[%s285 + $0x10] sm:$0xf]
          %v824 = vld [vmem:[%s285 + $0x14] sm:$0xf]
          %v825 = vld [vmem:[%s285 + $0x18] sm:$0xf]
          %v826 = vld [vmem:[%s285 + $0x1c] sm:$0xf]
          %v827 = vld [vmem:[%s285 + $0x20] sm:$0xf]
          %v828 = vld [vmem:[%s285 + $0x24] sm:$0xf]
          %v829 = vld [vmem:[%s285 + $0x28] sm:$0xf]
          %v830 = vld [vmem:[%s285 + $0x2c] sm:$0xf]
          %v831 = vld [vmem:[%s285 + $0x30] sm:$0xf]
          %v832 = vld [vmem:[%s285 + $0x34] sm:$0xf]
          %v833 = vld [vmem:[%s285 + $0x38] sm:$0xf]
          %v834 = vld [vmem:[%s285 + $0x3c] sm:$0xf]
          %v835 = vunpack.c.l.bf16 %v819
          %v836 = vunpack.c.l.bf16 %v820
          %v837 = vunpack.c.l.bf16 %v821
          %v838 = vunpack.c.l.bf16 %v822
          %v839 = vunpack.c.l.bf16 %v823
          %v840 = vunpack.c.l.bf16 %v824
          %v841 = vunpack.c.l.bf16 %v825
          %v842 = vunpack.c.l.bf16 %v826
          %v843 = vunpack.c.l.bf16 %v827
          %v844 = vunpack.c.l.bf16 %v828
          %v845 = vunpack.c.l.bf16 %v829
          %v846 = vunpack.c.l.bf16 %v830
          %v847 = vunpack.c.l.bf16 %v831
          %v848 = vunpack.c.l.bf16 %v832
          %v849 = vunpack.c.l.bf16 %v833
          %v850 = vunpack.c.l.bf16 %v834
          %v851 = vadd.f32 %v803, %v835
          %v852 = vadd.f32 %v804, %v836
          %v853 = vadd.f32 %v805, %v837
          %v854 = vadd.f32 %v806, %v838
          %v855 = vadd.f32 %v807, %v839
          %v856 = vadd.f32 %v808, %v840
          %v857 = vadd.f32 %v809, %v841
          %v858 = vadd.f32 %v810, %v842
          %v859 = vadd.f32 %v811, %v843
          %v860 = vadd.f32 %v812, %v844
          %v861 = vadd.f32 %v813, %v845
          %v862 = vadd.f32 %v814, %v846
          %v863 = vadd.f32 %v815, %v847
          %v864 = vadd.f32 %v816, %v848
          %v865 = vadd.f32 %v817, %v849
          %v866 = vadd.f32 %v818, %v850
          %867 = vst [vmem:[%s323] sm:$0xff] %v851
          %868 = vst [vmem:[%s323 + $0x8] sm:$0xff] %v852
          %869 = vst [vmem:[%s323 + $0x10] sm:$0xff] %v853
          %870 = vst [vmem:[%s323 + $0x18] sm:$0xff] %v854
          %871 = vst [vmem:[%s323 + $0x20] sm:$0xff] %v855
          %872 = vst [vmem:[%s323 + $0x28] sm:$0xff] %v856
          %873 = vst [vmem:[%s323 + $0x30] sm:$0xff] %v857
          %874 = vst [vmem:[%s323 + $0x38] sm:$0xff] %v858
          %875 = vst [vmem:[%s323 + $0x40] sm:$0xff] %v859
          %876 = vst [vmem:[%s323 + $0x48] sm:$0xff] %v860
          %877 = vst [vmem:[%s323 + $0x50] sm:$0xff] %v861
          %878 = vst [vmem:[%s323 + $0x58] sm:$0xff] %v862
          %879 = vst [vmem:[%s323 + $0x60] sm:$0xff] %v863
          %880 = vst [vmem:[%s323 + $0x68] sm:$0xff] %v864
          %881 = vst [vmem:[%s323 + $0x70] sm:$0xff] %v865
          %882 = vst [vmem:[%s323 + $0x78] sm:$0xff] %v866
        $region60: #{tpu_custom_call.1} parent=35 // pred_fallthru
          _
        %s883 = sand.u32 %s146, 1
        %s884 = scalar_lea.sflag [#allocation5], %s883
        %s885 = sand.u32 %s146, 1
        %s886 = smul.addr %s885, 128
        %s887 = scalar_lea.vmem [#allocation11], %s886
        // Predicated region
        $region61: #{tpu_custom_call.1} parent=35 // pred_check
          %p888 = pneg %p156
        $region62: #{tpu_custom_call.1} parent=35 // pred_check_branch
          %890 = sbr.rel (%p888) target = $region64
        $region63: #{tpu_custom_call.1} parent=35 // pred_region
          %s891 = smul.u32 16, %s29
          %s893 = ssub.s32 2048, 2048
          %894 = vsyncadd %s884, %s893
          %s895 = smul.addr %s891, 128
          %s896 = scalar_lea.hbm %s4, %s895
          %s897 = sshll.u32 %s887, 4
          %s898 = int_to_ptr.vmem [resolvable:$true] %s897
          %903 = dma.vmem_to_hbm [thread:$0]  %s898, 2048, %s896, %s884, 128, 128, 8
        $region64: #{tpu_custom_call.1} parent=35 // pred_fallthru
          _
      $region36: #{tpu_custom_call.1} parent=5 // pred_fallthru
        _
      %p904 = scmp.le.s32.totalorder 2, %s20
      // Predicated region
      $region65: #{tpu_custom_call.1} parent=5 // pred_check
        %p905 = pneg %p904
      $region66: #{tpu_custom_call.1} parent=5 // pred_check_branch
        %907 = sbr.rel (%p905) target = $region68
      $region67: #{tpu_custom_call.1} parent=5 // pred_region
        %s908 = ssub.s32 %s20, 2
        // Predicated region
        $region69: #{tpu_custom_call.1} parent=67 // pred_check
          %p909 = pneg %p162
        $region70: #{tpu_custom_call.1} parent=67 // pred_check_branch
          %911 = sbr.rel (%p909) target = $region72
        $region71: #{tpu_custom_call.1} parent=67 // pred_region
          %s912 = sand.u32 %s147, 1
          %s913 = scalar_lea.sflag [#allocation5], %s912
          %s914 = sand.u32 %s147, 1
          %s915 = smul.addr %s914, 128
          %s916 = scalar_lea.vmem [#allocation11], %s915
          %917 = dma.done %s913, 2048
        $region72: #{tpu_custom_call.1} parent=67 // pred_fallthru
          _
      $region68: #{tpu_custom_call.1} parent=5 // pred_fallthru
        _
    $region6: #{tpu_custom_call.1} parent=1 // loop_footer
      %s24 = sadd.s32 1, %s20
    $region7: #{tpu_custom_call.1} parent=1 // loop_footer_branch
      %19 = sbr.rel target = $region3
    $region8: #{tpu_custom_call.1} parent=1 // loop_exit
      _
    %918 = vsyncpa [#allocation4], 1
    %s919 = scalar_lea.sflag [#allocation4], 1
    %920 = vsyncpa %s919, 1
    %921 = vsyncpa [#allocation7], 1
    %s922 = scalar_lea.sflag [#allocation7], 1
    %923 = vsyncpa %s922, 1
    %924 = vsyncpa [#allocation10], 1
    %925 = vsyncpa [#allocation5], 1
    %s926 = scalar_lea.sflag [#allocation5], 1
    %927 = vsyncpa %s926, 1

</llo_original>
